<compile_context>
chip_gen: v6e
topology: v6e:2x2x1
jax: 0.10.0
libtpu: 0.0.40
codegen_flags: <defaults>
</compile_context>

<pallas_src>
import functools

import jax
import jax.numpy as jnp
from jax.experimental import pallas as pl
from jax.experimental.pallas import tpu as pltpu


def _round_up(n: int, m: int) -> int:
    return ((n + m - 1) // m) * m


def _pad_axis(a, axis: int, target: int):
    pad = target - a.shape[axis]
    if pad == 0:
        return a
    widths = [(0, 0)] * a.ndim
    widths[axis] = (0, pad)
    return jnp.pad(a, widths)


# ---------------------------------------------------------------------------
# Kernel: one batch tile x one hidden chunk per grid step.
#   grid = (batch_tiles, hidden_chunks); hidden axis is the reduction ("arbitrary").
# ---------------------------------------------------------------------------
def _mlp_kernel(x_ref, w1_ref, b1_ref, w2_ref, b2_ref, o_ref, acc_ref):
    h_idx = pl.program_id(1)

    @pl.when(h_idx == 0)
    def _init():
        acc_ref[...] = jnp.zeros_like(acc_ref)

    # fc1 on the current hidden chunk: bf16 operands on the MXU, f32 accumulate.
    # x is cast to bf16 in-kernel (hides under the MXU; saves a wrapper pass).
    xb = x_ref[...].astype(jnp.bfloat16)
    h = jnp.dot(xb, w1_ref[...], preferred_element_type=jnp.float32)
    h = jnp.maximum(h + b1_ref[...], 0.0)  # bias + ReLU in f32 on the VPU

    # fc3 partial product for this hidden chunk, accumulated in f32.
    acc_ref[...] += jnp.dot(h.astype(jnp.bfloat16), w2_ref[...],
                            preferred_element_type=jnp.float32)

    @pl.when(h_idx == pl.num_programs(1) - 1)
    def _finalize():
        y = acc_ref[...] + b2_ref[...]
        # sigmoid(y) = 1 / (1 + exp(-y)); exp and reciprocal land on the EUP slot.
        o_ref[...] = pl.reciprocal(1.0 + jnp.exp(-y), approx=False).astype(o_ref.dtype)


# ---------------------------------------------------------------------------
# One-time feature detection for single-buffered (resident) weight blocks.
# ---------------------------------------------------------------------------
def _probe_copy_kernel(x_ref, o_ref):
    o_ref[...] = x_ref[...]


@functools.lru_cache(maxsize=None)
def _buffered_one_supported() -> bool:
    try:
        x = jnp.zeros((8, 128), jnp.float32)
        fn = pl.pallas_call(
            _probe_copy_kernel,
            out_shape=jax.ShapeDtypeStruct((8, 128), jnp.float32),
            grid_spec=pltpu.PrefetchScalarGridSpec(
                num_scalar_prefetch=0,
                grid=(1,),
                in_specs=[pl.BlockSpec((8, 128), lambda i: (0, 0),
                                       pipeline_mode=pl.Buffered(1))],
                out_specs=pl.BlockSpec((8, 128), lambda i: (0, 0)),
            ),
        )
        jax.block_until_ready(fn(x))
        return True
    except Exception:
        # Probe only: any failure just disables the Buffered(1) optimization;
        # real kernel errors are never swallowed here.
        return False


# ---------------------------------------------------------------------------
# VMEM sizing helpers.
# ---------------------------------------------------------------------------
def _vmem_budget_bytes() -> int:
    try:
        cap = int(pltpu.get_tpu_info().vmem_capacity_bytes)
    except Exception:
        cap = 64 << 20  # conservative default: v7x-class 64 MiB per TensorCore
    # 20% headroom for compiler-internal scratch and spilled intermediates.
    return int(cap * 0.8)


def _vmem_cost(IN, tH, OUT_p, bt, w_bufs) -> int:
    """Honest VMEM estimate for one pipeline configuration (bytes)."""
    return (
        2 * bt * IN * 4                          # x tile (f32), double-buffered
        + bt * IN * 2                            # in-kernel bf16 cast of the x tile
        + 2 * bt * OUT_p * 4                     # output tile (f32), double-buffered
        + bt * OUT_p * 4                         # f32 accumulator scratch
        + w_bufs * (IN * tH + tH * OUT_p) * 2    # w1 / w2 chunks (bf16)
        + w_bufs * tH * 4 + OUT_p * 4            # b1 chunk + b2 (f32)
        + bt * tH * (4 + 2)                      # f32 hidden activation + bf16 recast
    )


# ---------------------------------------------------------------------------
# One-time parameter preparation (hoisted out of the per-call wrapper).
# ---------------------------------------------------------------------------
def prepare_params(w1, b1, w2, b2):
    """Pad hidden/output lanes and cast weights to bf16 ONCE.

    w1: (IN, H); b1: (H,) or (1, H); w2: (H, OUT); b2: (OUT,) or (1, OUT)
    (weights stored pre-transposed relative to PyTorch's (out, in) layout).
    """
    IN, H = w1.shape
    OUT = w2.shape[1]
    # 256 granularity feeds the 256-wide v6e/v7x MXU; keep 128 for small H.
    h_align = 256 if H >= 256 else 128
    H_p = _round_up(H, h_align)
    OUT_p = _round_up(OUT, 128)

    w1_p = _pad_axis(w1, 1, H_p).astype(jnp.bfloat16)                       # (IN, H_p)
    b1_p = _pad_axis(jnp.reshape(b1, (1, H)).astype(jnp.float32), 1, H_p)   # (1, H_p)
    w2_p = _pad_axis(_pad_axis(w2, 0, H_p), 1, OUT_p).astype(jnp.bfloat16)  # (H_p, OUT_p)
    b2_p = _pad_axis(jnp.reshape(b2, (1, OUT)).astype(jnp.float32), 1, OUT_p)

    return {
        "w1": w1_p, "b1": b1_p, "w2": w2_p, "b2": b2_p,
        "IN": IN, "H": H, "OUT": OUT, "H_p": H_p, "OUT_p": OUT_p,
        "h_align": h_align,
    }


# ---------------------------------------------------------------------------
# Forward pass.
# ---------------------------------------------------------------------------
def three_layer_classifier(x, params, *, batch_tile=None):
    """sigmoid(relu(x @ w1 + b1) @ w2 + b2). x: (B, IN) float."""
    B, IN = x.shape
    assert IN == params["IN"], "input feature size mismatch with prepared params"
    H_p, OUT_p, OUT = params["H_p"], params["OUT_p"], params["OUT"]
    h_align = params["h_align"]

    budget = _vmem_budget_bytes()
    buffered1 = _buffered_one_supported()

    # ---- batch tiling: 512-row tiles on v5e/v6e-class VMEM, 256 on v7x-class;
    #      only create >=2 'parallel' steps when every step keeps >= target rows.
    if batch_tile is None:
        target = 512 if budget >= (96 << 20) else 256
        batch_tile = target if B >= 2 * target else B

    if batch_tile >= B:
        batch_tile, grid_b, B_p = B, 1, B
        x_in = x                                   # single full-extent step, no copy
    else:
        batch_tile = max(8, (batch_tile // 8) * 8)
        B_p = _round_up(B, batch_tile)
        grid_b = B_p // batch_tile
        x_in = _pad_axis(x, 0, B_p) if B_p != B else x   # pad only remainder rows

    # ---- hidden-dim residency vs. streaming (handles the v7x 64 MiB VMEM cliff).
    resident_bufs = 1 if buffered1 else 2
    if _vmem_cost(IN, H_p, OUT_p, batch_tile, resident_bufs) <= budget:
        tH, n_h, weights_resident = H_p, 1, True
    else:
        weights_resident = False
        tH = h_align
        for cand in range(H_p, h_align - 1, -h_align):
            if H_p % cand == 0 and _vmem_cost(IN, cand, OUT_p, batch_tile, 2) <= budget:
                tH = cand
                break
        n_h = H_p // tH

    def weight_spec(shape, index_map):
        # Resident (constant-index) weight blocks only need a single VMEM buffer;
        # streamed hidden chunks keep the default double buffering.
        if weights_resident and buffered1:
            return pl.BlockSpec(shape, index_map, pipeline_mode=pl.Buffered(1))
        return pl.BlockSpec(shape, index_map)

    out = pl.pallas_call(
        _mlp_kernel,
        out_shape=jax.ShapeDtypeStruct((B_p, OUT_p), jnp.float32),
        grid_spec=pltpu.PrefetchScalarGridSpec(
            num_scalar_prefetch=0,
            grid=(grid_b, n_h),
            in_specs=[
                pl.BlockSpec((batch_tile, IN), lambda i, h: (i, 0)),  # x tile (f32, full IN)
                weight_spec((IN, tH), lambda i, h: (0, h)),           # w1 chunk (bf16)
                weight_spec((1, tH), lambda i, h: (0, h)),            # b1 chunk (f32)
                weight_spec((tH, OUT_p), lambda i, h: (h, 0)),        # w2 chunk (bf16)
                weight_spec((1, OUT_p), lambda i, h: (0, 0)),         # b2 (f32)
            ],
            out_specs=pl.BlockSpec((batch_tile, OUT_p), lambda i, h: (i, 0)),
            scratch_shapes=[pltpu.VMEM((batch_tile, OUT_p), jnp.float32)],
        ),
        compiler_params=pltpu.CompilerParams(
            dimension_semantics=("parallel", "arbitrary"),
            vmem_limit_bytes=budget,
        ),
    )(x_in, params["w1"], params["b1"], params["w2"], params["b2"])

    return out[:B, :OUT]


def init_params(key, input_size, hidden_size1, output_size):
    """Deterministic init mimicking nn.Linear's U(-1/sqrt(fan_in), 1/sqrt(fan_in))."""
    k1, k2, k3, k4 = jax.random.split(key, 4)
    bound1 = 1.0 / jnp.sqrt(jnp.float32(input_size))
    bound2 = 1.0 / jnp.sqrt(jnp.float32(hidden_size1))
    # Stored as (in, out) = transpose of PyTorch's (out, in) weight layout.
    w1 = jax.random.uniform(k1, (input_size, hidden_size1), jnp.float32, -bound1, bound1)
    b1 = jax.random.uniform(k2, (1, hidden_size1), jnp.float32, -bound1, bound1)
    w2 = jax.random.uniform(k3, (hidden_size1, output_size), jnp.float32, -bound2, bound2)
    b2 = jax.random.uniform(k4, (1, output_size), jnp.float32, -bound2, bound2)
    return w1, b1, w2, b2


if __name__ == "__main__":
    # Small shapes consistent with the module: x is (batch, input_size).
    batch, input_size, hidden_size1, output_size = 8, 32, 64, 16

    key = jax.random.PRNGKey(0)
    kx, kp = jax.random.split(key)
    x = jax.random.normal(kx, (batch, input_size), jnp.float32)
    w1, b1, w2, b2 = init_params(kp, input_size, hidden_size1, output_size)

    params = prepare_params(w1, b1, w2, b2)   # one-time weight pad + bf16 cast
    out = three_layer_classifier(x, params)
    out = jax.block_until_ready(out)

    # Reference in plain JAX with the same bf16-operand / f32-accumulate math.
    h_ref = jnp.maximum(
        jnp.dot(x.astype(jnp.bfloat16), w1.astype(jnp.bfloat16),
                preferred_element_type=jnp.float32) + b1, 0.0)
    y_ref = jnp.dot(h_ref.astype(jnp.bfloat16), w2.astype(jnp.bfloat16),
                    preferred_element_type=jnp.float32) + b2
    ref = jax.nn.sigmoid(y_ref)

    assert out.shape == (batch, output_size)
    max_err = float(jnp.max(jnp.abs(out - ref)))
    assert jnp.allclose(out, ref, atol=2e-3, rtol=2e-3), f"max_err={max_err}"

    print("KERNEL_OK")
</pallas_src>

<mosaic_0001>
module attributes {stable_mosaic.version = 11 : i64} {
  func.func @_probe_copy_kernel(%arg0: i32, %arg1: memref<8x128xf32, #tpu.memory_space<vmem>>, %arg2: memref<8x128xf32, #tpu.memory_space<vmem>>) attributes {dimension_semantics = [#tpu.dimension_semantics<arbitrary>], iteration_bounds = array<i64: 1>, scalar_prefetch = 0 : i64, scratch_operands = 0 : i64, tpu.core_type = #tpu.core_type<tc>, window_params = [{pipeline_mode = #tpu.pipeline_mode<synchronous>, transform_indices = @transform_0, window_bounds = array<i64: 8, 128>}, {pipeline_mode = #tpu.pipeline_mode<synchronous>, transform_indices = @transform_1, window_bounds = array<i64: 8, 128>}]} {
    %c0 = arith.constant 0 : index
    %c0_0 = arith.constant 0 : index
    %0 = vector.load %arg1[%c0, %c0_0] : memref<8x128xf32, #tpu.memory_space<vmem>>, vector<8x128xf32>
    %c0_1 = arith.constant 0 : index
    %c0_2 = arith.constant 0 : index
    %1 = vector.load %arg2[%c0_1, %c0_2] : memref<8x128xf32, #tpu.memory_space<vmem>>, vector<8x128xf32>
    tpu.vector_store %arg2[%c0_1, %c0_2], %0 {strides = array<i32>} : memref<8x128xf32, #tpu.memory_space<vmem>>, vector<8x128xf32>,
    return
  }
  func.func @transform_0(%arg0: i32) -> (i32, i32) {
    %c0_i32 = arith.constant 0 : i32
    %c0_i32_0 = arith.constant 0 : i32
    %c0_i32_1 = arith.constant 0 : i32
    return %c0_i32, %c0_i32_0 : i32, i32
  }
  func.func @transform_1(%arg0: i32) -> (i32, i32) {
    %c0_i32 = arith.constant 0 : i32
    %c0_i32_0 = arith.constant 0 : i32
    %c0_i32_1 = arith.constant 0 : i32
    return %c0_i32, %c0_i32_0 : i32, i32
  }
}

module attributes {stable_mosaic.version = 11 : i64} {
  func.func @_mlp_kernel(%arg0: i32, %arg1: i32, %arg2: memref<8x32xf32, #tpu.memory_space<vmem>>, %arg3: memref<32x128xbf16, #tpu.memory_space<vmem>>, %arg4: memref<1x128xf32, #tpu.memory_space<vmem>>, %arg5: memref<128x128xbf16, #tpu.memory_space<vmem>>, %arg6: memref<1x128xf32, #tpu.memory_space<vmem>>, %arg7: memref<8x128xf32, #tpu.memory_space<vmem>>, %arg8: memref<8x128xf32, #tpu.memory_space<vmem>>) attributes {dimension_semantics = [#tpu.dimension_semantics<parallel>, #tpu.dimension_semantics<arbitrary>], iteration_bounds = array<i64: 1, 1>, scalar_prefetch = 0 : i64, scratch_operands = 1 : i64, tpu.core_type = #tpu.core_type<tc>, window_params = [{transform_indices = @transform_0, window_bounds = array<i64: 8, 32>}, {transform_indices = @transform_1, window_bounds = array<i64: 32, 128>}, {transform_indices = @transform_2, window_bounds = array<i64: 1, 128>}, {transform_indices = @transform_3, window_bounds = array<i64: 128, 128>}, {pipeline_mode = #tpu.pipeline_mode<synchronous>, transform_indices = @transform_4, window_bounds = array<i64: 1, 128>}, {transform_indices = @transform_5, window_bounds = array<i64: 8, 128>}]} {
    %c0_i32 = arith.constant 0 : i32
    %0 = arith.cmpi eq, %arg1, %c0_i32 : i32
    %1 = arith.extui %0 : i1 to i32
    %c0_i32_0 = arith.constant 0 : i32
    %2 = arith.cmpi ne, %1, %c0_i32_0 : i32
    scf.if %2 {
      %cst_16 = arith.constant 0.000000e+00 : f32
      %21 = vector.broadcast %cst_16 : f32 to vector<8x128xf32>
      %c0_17 = arith.constant 0 : index
      %c0_18 = arith.constant 0 : index
      %22 = vector.load %arg8[%c0_17, %c0_18] : memref<8x128xf32, #tpu.memory_space<vmem>>, vector<8x128xf32>
      tpu.vector_store %arg8[%c0_17, %c0_18], %21 {strides = array<i32>} : memref<8x128xf32, #tpu.memory_space<vmem>>, vector<8x128xf32>,
    } else {
    }
    %c0 = arith.constant 0 : index
    %c0_1 = arith.constant 0 : index
    %3 = vector.load %arg2[%c0, %c0_1] : memref<8x32xf32, #tpu.memory_space<vmem>>, vector<8x32xf32>
    %4 = arith.truncf %3 : vector<8x32xf32> to vector<8x32xbf16>
    %c0_2 = arith.constant 0 : index
    %c0_3 = arith.constant 0 : index
    %5 = vector.load %arg3[%c0_2, %c0_3] : memref<32x128xbf16, #tpu.memory_space<vmem>>, vector<32x128xbf16>
    %cst = arith.constant dense<0.000000e+00> : vector<8x128xf32>
    %6 = tpu.matmul %4, %5, %cst {dimension_numbers = #tpu.dot_dimension_numbers<[1], [0], [0], [1], [0, 0, 1, 1], [], []>} : vector<8x32xbf16>, vector<32x128xbf16>, vector<8x128xf32> -> vector<8x128xf32>
    %c0_4 = arith.constant 0 : index
    %c0_5 = arith.constant 0 : index
    %7 = vector.load %arg4[%c0_4, %c0_5] : memref<1x128xf32, #tpu.memory_space<vmem>>, vector<1x128xf32>
    %8 = vector.broadcast %7 : vector<1x128xf32> to vector<8x128xf32>
    %9 = arith.addf %6, %8 : vector<8x128xf32>
    %cst_6 = arith.constant 0.000000e+00 : f32
    %10 = vector.broadcast %cst_6 : f32 to vector<8x128xf32>
    %11 = arith.maximumf %9, %10 : vector<8x128xf32>
    %c0_7 = arith.constant 0 : index
    %c0_8 = arith.constant 0 : index
    %12 = vector.load %arg8[%c0_7, %c0_8] : memref<8x128xf32, #tpu.memory_space<vmem>>, vector<8x128xf32>
    %13 = arith.truncf %11 : vector<8x128xf32> to vector<8x128xbf16>
    %c0_9 = arith.constant 0 : index
    %c0_10 = arith.constant 0 : index
    %14 = vector.load %arg5[%c0_9, %c0_10] : memref<128x128xbf16, #tpu.memory_space<vmem>>, vector<128x128xbf16>
    %cst_11 = arith.constant dense<0.000000e+00> : vector<8x128xf32>
    %15 = tpu.matmul %13, %14, %cst_11 {dimension_numbers = #tpu.dot_dimension_numbers<[1], [0], [0], [1], [0, 0, 1, 1], [], []>} : vector<8x128xbf16>, vector<128x128xbf16>, vector<8x128xf32> -> vector<8x128xf32>
    %16 = arith.addf %12, %15 : vector<8x128xf32>
    %c0_12 = arith.constant 0 : index
    %c0_13 = arith.constant 0 : index
    %17 = vector.load %arg8[%c0_12, %c0_13] : memref<8x128xf32, #tpu.memory_space<vmem>>, vector<8x128xf32>
    tpu.vector_store %arg8[%c0_12, %c0_13], %16 {strides = array<i32>} : memref<8x128xf32, #tpu.memory_space<vmem>>, vector<8x128xf32>,
    %c0_i32_14 = arith.constant 0 : i32
    %18 = arith.cmpi eq, %arg1, %c0_i32_14 : i32
    %19 = arith.extui %18 : i1 to i32
    %c0_i32_15 = arith.constant 0 : i32
    %20 = arith.cmpi ne, %19, %c0_i32_15 : i32
    scf.if %20 {
      %c0_16 = arith.constant 0 : index
      %c0_17 = arith.constant 0 : index
      %21 = vector.load %arg8[%c0_16, %c0_17] : memref<8x128xf32, #tpu.memory_space<vmem>>, vector<8x128xf32>
      %c0_18 = arith.constant 0 : index
      %c0_19 = arith.constant 0 : index
      %22 = vector.load %arg6[%c0_18, %c0_19] : memref<1x128xf32, #tpu.memory_space<vmem>>, vector<1x128xf32>
      %23 = vector.broadcast %22 : vector<1x128xf32> to vector<8x128xf32>
      %24 = arith.addf %21, %23 : vector<8x128xf32>
      %cst_20 = arith.constant 0.000000e+00 : f32
      %25 = vector.broadcast %cst_20 : f32 to vector<8x128xf32>
      %26 = arith.subf %25, %24 : vector<8x128xf32>
      %27 = math.exp %26 : vector<8x128xf32>
      %cst_21 = arith.constant 1.000000e+00 : f32
      %28 = vector.broadcast %cst_21 : f32 to vector<8x128xf32>
      %29 = arith.addf %28, %27 : vector<8x128xf32>
      %30 = tpu.reciprocal %29 : vector<8x128xf32> -> vector<8x128xf32>
      %c0_22 = arith.constant 0 : index
      %c0_23 = arith.constant 0 : index
      %31 = vector.load %arg7[%c0_22, %c0_23] : memref<8x128xf32, #tpu.memory_space<vmem>>, vector<8x128xf32>
      tpu.vector_store %arg7[%c0_22, %c0_23], %30 {strides = array<i32>} : memref<8x128xf32, #tpu.memory_space<vmem>>, vector<8x128xf32>,
    } else {
    }
    return
  }
  func.func @transform_0(%arg0: i32, %arg1: i32) -> (i32, i32) {
    %c0_i32 = arith.constant 0 : i32
    %c0_i32_0 = arith.constant 0 : i32
    return %arg0, %c0_i32 : i32, i32
  }
  func.func @transform_1(%arg0: i32, %arg1: i32) -> (i32, i32) {
    %c0_i32 = arith.constant 0 : i32
    %c0_i32_0 = arith.constant 0 : i32
    return %c0_i32, %arg1 : i32, i32
  }
  func.func @transform_2(%arg0: i32, %arg1: i32) -> (i32, i32) {
    %c0_i32 = arith.constant 0 : i32
    %c0_i32_0 = arith.constant 0 : i32
    return %c0_i32, %arg1 : i32, i32
  }
  func.func @transform_3(%arg0: i32, %arg1: i32) -> (i32, i32) {
    %c0_i32 = arith.constant 0 : i32
    %c0_i32_0 = arith.constant 0 : i32
    return %arg1, %c0_i32 : i32, i32
  }
  func.func @transform_4(%arg0: i32, %arg1: i32) -> (i32, i32) {
    %c0_i32 = arith.constant 0 : i32
    %c0_i32_0 = arith.constant 0 : i32
    %c0_i32_1 = arith.constant 0 : i32
    return %c0_i32, %c0_i32_0 : i32, i32
  }
  func.func @transform_5(%arg0: i32, %arg1: i32) -> (i32, i32) {
    %c0_i32 = arith.constant 0 : i32
    %c0_i32_0 = arith.constant 0 : i32
    return %arg0, %c0_i32 : i32, i32
  }
}

</mosaic_0001>

<llo_original>
// kernel: tpu_custom_call.1
$region0: #{tpu_custom_call.1}
  #allocation0 [shape = 'u32[]', space=smem, size = 0x4, offset = 0x4, fixed_abs, tag = 'smem constant byte address 0x4 - core index']
  #allocation1 [shape = 'u32[144,128]{1,0:T(1,128)}', space=vmem, size = 0x12000, scoped, tag = 'internal scratch']
  %s0 = inlined_call_operand.hbm [shape: f32[8,128], index: 0, kind: input, shape index: {}]
  %s1 = inlined_call_operand.hbm [shape: f32[8,128], index: 1, kind: output, shape index: {}]
  %s2 = sld [smem:[#allocation0]]
  $region18: #{tpu_custom_call.1} parent=0
    _
  %s4 = ssub.s32 1, %s2
  %s5 = scalar_select 0, %s4, %s2
  $region1: #{tpu_custom_call.1} parent=0
    #allocation2 [shape = 'u8[4096]{0}', space=vmem, size = 0x1000, scoped, tag = 'input window, operand 0, single buffered']
    #allocation3 [shape = 's32[1]{0}', space=sflag, size = 0x4, scoped, tag = 'scoped memory for tpu_custom_call.1']
    #allocation4 [shape = 's32[1]{0}', space=sflag, size = 0x4, scoped, tag = 'scoped memory for tpu_custom_call.1']
    #allocation5 [shape = 'u8[4096]{0}', space=vmem, size = 0x1000, scoped, tag = 'output window, operand 0, single buffered']
    %6 = vsyncpa [#allocation3], 0
    %7 = vsyncpa [#allocation4], 0
    // Predicated region
    $region2: #{tpu_custom_call.1} parent=1 // pred_check
      _
    $region3: #{tpu_custom_call.1} parent=1 // pred_check_branch
      %9 = sbr.rel (0) target = $region5
    $region4: #{tpu_custom_call.1} parent=1 // pred_region
      %s11 = ssub.s32 128, 128
      %12 = vsyncadd [#allocation3], %s11
      %s14 = sshll.u32 [#allocation2], 4
      %s15 = int_to_ptr.vmem [resolvable:$true] %s14
      %17 = dma.hbm_to_vmem [thread:$0]  %s0, 128, %s15, [#allocation3]
    $region5: #{tpu_custom_call.1} parent=1 // pred_fallthru
      _
    // Predicated region
    $region6: #{tpu_custom_call.1} parent=1 // pred_check
      _
    $region7: #{tpu_custom_call.1} parent=1 // pred_check_branch
      %19 = sbr.rel (0) target = $region9
    $region8: #{tpu_custom_call.1} parent=1 // pred_region
      %20 = dma.done [#allocation3], 128
    $region9: #{tpu_custom_call.1} parent=1 // pred_fallthru
      _
    %v21 = vld [vmem:[#allocation2] sm:$0xff]
    %22 = vst [vmem:[#allocation5] sm:$0xff] %v21
    // Predicated region
    $region10: #{tpu_custom_call.1} parent=1 // pred_check
      _
    $region11: #{tpu_custom_call.1} parent=1 // pred_check_branch
      %24 = sbr.rel (0) target = $region13
    $region12: #{tpu_custom_call.1} parent=1 // pred_region
      %s26 = ssub.s32 128, 128
      %27 = vsyncadd [#allocation4], %s26
      %s29 = sshll.u32 [#allocation5], 4
      %s30 = int_to_ptr.vmem [resolvable:$true] %s29
      %32 = dma.vmem_to_hbm [thread:$0]  %s30, 128, %s1, [#allocation4]
    $region13: #{tpu_custom_call.1} parent=1 // pred_fallthru
      _
    // Predicated region
    $region14: #{tpu_custom_call.1} parent=1 // pred_check
      _
    $region15: #{tpu_custom_call.1} parent=1 // pred_check_branch
      %34 = sbr.rel (0) target = $region17
    $region16: #{tpu_custom_call.1} parent=1 // pred_region
      %35 = dma.done [#allocation4], 128
    $region17: #{tpu_custom_call.1} parent=1 // pred_fallthru
      _
    %36 = vsyncpa [#allocation3], 1
    %37 = vsyncpa [#allocation4], 1

// kernel: tpu_custom_call.1
$region0: #{tpu_custom_call.1}
  #allocation0 [shape = 'u32[]', space=smem, size = 0x4, offset = 0x4, fixed_abs, tag = 'smem constant byte address 0x4 - core index']
  #allocation1 [shape = 'u32[144,128]{1,0:T(1,128)}', space=vmem, size = 0x12000, scoped, tag = 'internal scratch']
  #allocation2 [shape = 'f32[8,128]{1,0:T(8,128)}', space=vmem, size = 0x1000, scoped, tag = 'scratch operand']
  %s0 = inlined_call_operand.hbm [shape: f32[8,32], index: 0, kind: input, shape index: {}]
  %s1 = inlined_call_operand.hbm [shape: bf16[32,128], index: 1, kind: input, shape index: {}]
  %s2 = inlined_call_operand.vmem [shape: f32[1,128], index: 2, kind: input, shape index: {}]
  %s3 = inlined_call_operand.hbm [shape: bf16[128,128], index: 3, kind: input, shape index: {}]
  %s4 = inlined_call_operand.vmem [shape: f32[1,128], index: 4, kind: input, shape index: {}]
  %s5 = inlined_call_operand.hbm [shape: f32[8,128], index: 5, kind: output, shape index: {}]
  %s6 = sld [smem:[#allocation0]]
  $region50: #{tpu_custom_call.1} parent=0
    _
  %s8 = ssub.s32 1, %s6
  %s9 = scalar_select 0, %s8, %s6
  $region1: #{tpu_custom_call.1} parent=0
    #allocation3 [shape = 'u8[4096]{0}', space=vmem, size = 0x1000, scoped, tag = 'input window, operand 0, single buffered']
    #allocation4 [shape = 's32[1]{0}', space=sflag, size = 0x4, scoped, tag = 'scoped memory for tpu_custom_call.1']
    #allocation5 [shape = 's32[1]{0}', space=sflag, size = 0x4, scoped, tag = 'scoped memory for tpu_custom_call.1']
    #allocation6 [shape = 'u8[8192]{0}', space=vmem, size = 0x2000, scoped, tag = 'input window, operand 1, single buffered']
    #allocation7 [shape = 's32[1]{0}', space=sflag, size = 0x4, scoped, tag = 'scoped memory for tpu_custom_call.1']
    #allocation8 [shape = 'u8[32768]{0}', space=vmem, size = 0x8000, scoped, tag = 'input window, operand 3, single buffered']
    #allocation9 [shape = 'u8[4096]{0}', space=vmem, size = 0x1000, scoped, tag = 'output window, operand 0, single buffered']
    %10 = vsyncpa [#allocation4], 0
    %11 = vsyncpa [#allocation7], 0
    %12 = vsyncpa [#allocation5], 0
    // Predicated region
    $region2: #{tpu_custom_call.1} parent=1 // pred_check
      _
    $region3: #{tpu_custom_call.1} parent=1 // pred_check_branch
      %14 = sbr.rel (0) target = $region5
    $region4: #{tpu_custom_call.1} parent=1 // pred_region
      %s16 = ssub.s32 128, 128
      %17 = vsyncadd [#allocation4], %s16
      %s19 = sshll.u32 [#allocation3], 4
      %s20 = int_to_ptr.vmem [resolvable:$true] %s19
      %22 = dma.hbm_to_vmem [thread:$0]  %s0, 128, %s20, [#allocation4]
    $region5: #{tpu_custom_call.1} parent=1 // pred_fallthru
      _
    // Predicated region
    $region6: #{tpu_custom_call.1} parent=1 // pred_check
      _
    $region7: #{tpu_custom_call.1} parent=1 // pred_check_branch
      %24 = sbr.rel (0) target = $region9
    $region8: #{tpu_custom_call.1} parent=1 // pred_region
      %s26 = ssub.s32 256, 256
      %27 = vsyncadd [#allocation7], %s26
      %s28 = sshll.u32 [#allocation6], 4
      %s29 = int_to_ptr.vmem [resolvable:$true] %s28
      %34 = dma.hbm_to_vmem [thread:$0]  %s1, 256, %s29, [#allocation7], 64, 64, 4
    $region9: #{tpu_custom_call.1} parent=1 // pred_fallthru
      _
    // Predicated region
    $region10: #{tpu_custom_call.1} parent=1 // pred_check
      _
    $region11: #{tpu_custom_call.1} parent=1 // pred_check_branch
      %36 = sbr.rel (0) target = $region13
    $region12: #{tpu_custom_call.1} parent=1 // pred_region
      _
    $region13: #{tpu_custom_call.1} parent=1 // pred_fallthru
      _
    // Predicated region
    $region14: #{tpu_custom_call.1} parent=1 // pred_check
      _
    $region15: #{tpu_custom_call.1} parent=1 // pred_check_branch
      %38 = sbr.rel (0) target = $region17
    $region16: #{tpu_custom_call.1} parent=1 // pred_region
      %s40 = ssub.s32 1024, 1024
      %41 = vsyncadd [#allocation7], %s40
      %s42 = sshll.u32 [#allocation8], 4
      %s43 = int_to_ptr.vmem [resolvable:$true] %s42
      %48 = dma.hbm_to_vmem [thread:$0]  %s3, 1024, %s43, [#allocation7], 64, 64, 4
    $region17: #{tpu_custom_call.1} parent=1 // pred_fallthru
      _
    // Predicated region
    $region18: #{tpu_custom_call.1} parent=1 // pred_check
      _
    $region19: #{tpu_custom_call.1} parent=1 // pred_check_branch
      %50 = sbr.rel (0) target = $region21
    $region20: #{tpu_custom_call.1} parent=1 // pred_region
      _
    $region21: #{tpu_custom_call.1} parent=1 // pred_fallthru
      _
    // Predicated region
    $region22: #{tpu_custom_call.1} parent=1 // pred_check
      _
    $region23: #{tpu_custom_call.1} parent=1 // pred_check_branch
      %52 = sbr.rel (0) target = $region25
    $region24: #{tpu_custom_call.1} parent=1 // pred_region
      %53 = dma.done [#allocation4], 128
    $region25: #{tpu_custom_call.1} parent=1 // pred_fallthru
      _
    // Predicated region
    $region26: #{tpu_custom_call.1} parent=1 // pred_check
      _
    $region27: #{tpu_custom_call.1} parent=1 // pred_check_branch
      %55 = sbr.rel (0) target = $region29
    $region28: #{tpu_custom_call.1} parent=1 // pred_region
      %56 = dma.done [#allocation7], 256
    $region29: #{tpu_custom_call.1} parent=1 // pred_fallthru
      _
    // Predicated region
    $region30: #{tpu_custom_call.1} parent=1 // pred_check
      _
    $region31: #{tpu_custom_call.1} parent=1 // pred_check_branch
      %58 = sbr.rel (0) target = $region33
    $region32: #{tpu_custom_call.1} parent=1 // pred_region
      %59 = dma.done [#allocation7], 1024
    $region33: #{tpu_custom_call.1} parent=1 // pred_fallthru
      _
    %p61 = scmp.eq.s32.totalorder 0, 0
    // Predicated region
    $region34: #{tpu_custom_call.1} parent=1 // pred_check
      %p62 = pneg %p61
    $region35: #{tpu_custom_call.1} parent=1 // pred_check_branch
      %64 = sbr.rel (%p62) target = $region37
    $region36: #{tpu_custom_call.1} parent=1 // pred_region
      %65 = vst [vmem:[#allocation2] sm:$0xff] 0.0
    $region37: #{tpu_custom_call.1} parent=1 // pred_fallthru
      _
    %v66 = vld [vmem:[#allocation3] sm:$0xff]
    %v67 = vpack.c.bf16 %v66, %v66
    %v68 = vld [vmem:[#allocation6] sm:$0xf]
    %v69 = vld [vmem:[#allocation6 + $0x4] sm:$0xf]
    %v70 = vld [vmem:[#allocation6 + $0x8] sm:$0xf]
    %v71 = vld [vmem:[#allocation6 + $0xc] sm:$0xf]
    %v72 = vld [vmem:[%s2] sm:$0x1]
    %v74 = vlaneseq
    %v75 = vshrl.u32 %v74, 7
    %v76 = vsub.s32 0, %v75
    %v77 = vrot.slane %v72, %v76
    %v83 = vunpack.c.l.b16 %v68
    %v84 = vunpack.c.l.b16 %v69
    %v85 = vunpack.c.l.b16 %v70
    %v86 = vunpack.c.l.b16 %v71
    %v87 = vpack.c.b16 %v84, %v83
    %v88 = vpack.c.b16 %v86, %v85
    %vm91 = vcmask 261120
    %v93 = vsel %vm91, %v67, 0
    %95 = vmatprep.subr.bf16.mxu0 0
    %96 = vmatpush1.bf16.msra.mxu0 0
    %97 = vmatprep.subr.bf16.mxu0 0
    %98 = vmatpush1.bf16.msra.mxu0 0
    %99 = vmatprep.subr.bf16.mxu0 0
    %100 = vmatpush1.bf16.msra.mxu0 0
    %101 = vmatprep.subr.bf16.mxu0 0
    %102 = vmatpush1.bf16.msra.mxu0 0
    %103 = vmatprep.subr.bf16.mxu0 0
    %104 = vmatpush1.bf16.msra.mxu0 0
    %105 = vmatprep.subr.bf16.mxu0 0
    %106 = vmatpush1.bf16.msra.mxu0 0
    %107 = vmatprep.subr.bf16.mxu0 0
    %108 = vmatpush1.bf16.msra.mxu0 %v88
    %109 = vmatprep.subr.bf16.mxu0 0
    %110 = vmatpush1.bf16.msra.mxu0 %v87
    %111 = vmatprep.subr.bf16.mxu0 0
    %112 = vmatpush2.bf16.msra.mxu0 0
    %113 = vmatprep.subr.bf16.mxu0 0
    %114 = vmatpush2.bf16.msra.mxu0 0
    %115 = vmatprep.subr.bf16.mxu0 0
    %116 = vmatpush2.bf16.msra.mxu0 0
    %117 = vmatprep.subr.bf16.mxu0 0
    %118 = vmatpush2.bf16.msra.mxu0 0
    %119 = vmatprep.subr.bf16.mxu0 0
    %120 = vmatpush2.bf16.msra.mxu0 0
    %121 = vmatprep.subr.bf16.mxu0 0
    %122 = vmatpush2.bf16.msra.mxu0 0
    %123 = vmatprep.subr.bf16.mxu0 0
    %124 = vmatpush2.bf16.msra.mxu0 0
    %125 = vmatprep.subr.bf16.mxu0 0
    %126 = vmatpush2.bf16.msra.mxu0 0
    %127 = vmatprep.mubr.bf16.mxu0 0
    %128 = vmatmul.mubr.bf16.gmra.mxu0 %v93
    %v129 = vpop.f32.mrf.mxu0
    %v130 = vadd.f32 %v77, %v129
    %v131 = vpop.f32.mrf.mxu0
    %v132 = vpop.f32.mrf.mxu0
    %v133 = vpop.f32.mrf.mxu0
    %134 = vdwg.mxu0
    %v135 = vmax.f32 %v130, 0.0
    %v136 = vld [vmem:[#allocation2] sm:$0xff]
    %v137 = vpack.c.bf16 %v135, %v135
    %v138 = vld [vmem:[#allocation8] sm:$0xf]
    %v139 = vld [vmem:[#allocation8 + $0x4] sm:$0xf]
    %v140 = vld [vmem:[#allocation8 + $0x8] sm:$0xf]
    %v141 = vld [vmem:[#allocation8 + $0xc] sm:$0xf]
    %v142 = vld [vmem:[#allocation8 + $0x10] sm:$0xf]
    %v143 = vld [vmem:[#allocation8 + $0x14] sm:$0xf]
    %v144 = vld [vmem:[#allocation8 + $0x18] sm:$0xf]
    %v145 = vld [vmem:[#allocation8 + $0x1c] sm:$0xf]
    %v146 = vld [vmem:[#allocation8 + $0x20] sm:$0xf]
    %v147 = vld [vmem:[#allocation8 + $0x24] sm:$0xf]
    %v148 = vld [vmem:[#allocation8 + $0x28] sm:$0xf]
    %v149 = vld [vmem:[#allocation8 + $0x2c] sm:$0xf]
    %v150 = vld [vmem:[#allocation8 + $0x30] sm:$0xf]
    %v151 = vld [vmem:[#allocation8 + $0x34] sm:$0xf]
    %v152 = vld [vmem:[#allocation8 + $0x38] sm:$0xf]
    %v153 = vld [vmem:[#allocation8 + $0x3c] sm:$0xf]
    %v170 = vunpack.c.l.b16 %v138
    %v171 = vunpack.c.l.b16 %v139
    %v172 = vunpack.c.l.b16 %v140
    %v173 = vunpack.c.l.b16 %v141
    %v174 = vunpack.c.l.b16 %v142
    %v175 = vunpack.c.l.b16 %v143
    %v176 = vunpack.c.l.b16 %v144
    %v177 = vunpack.c.l.b16 %v145
    %v178 = vunpack.c.l.b16 %v146
    %v179 = vunpack.c.l.b16 %v147
    %v180 = vunpack.c.l.b16 %v148
    %v181 = vunpack.c.l.b16 %v149
    %v182 = vunpack.c.l.b16 %v150
    %v183 = vunpack.c.l.b16 %v151
    %v184 = vunpack.c.l.b16 %v152
    %v185 = vunpack.c.l.b16 %v153
    %v186 = vpack.c.b16 %v171, %v170
    %v187 = vpack.c.b16 %v173, %v172
    %v188 = vpack.c.b16 %v175, %v174
    %v189 = vpack.c.b16 %v177, %v176
    %v190 = vpack.c.b16 %v179, %v178
    %v191 = vpack.c.b16 %v181, %v180
    %v192 = vpack.c.b16 %v183, %v182
    %v193 = vpack.c.b16 %v185, %v184
    %202 = vmatprep.subr.bf16.mxu0 0
    %203 = vmatpush1.bf16.msra.mxu0 %v193
    %204 = vmatprep.subr.bf16.mxu0 0
    %205 = vmatpush1.bf16.msra.mxu0 %v192
    %206 = vmatprep.subr.bf16.mxu0 0
    %207 = vmatpush1.bf16.msra.mxu0 %v191
    %208 = vmatprep.subr.bf16.mxu0 0
    %209 = vmatpush1.bf16.msra.mxu0 %v190
    %210 = vmatprep.subr.bf16.mxu0 0
    %211 = vmatpush1.bf16.msra.mxu0 %v189
    %212 = vmatprep.subr.bf16.mxu0 0
    %213 = vmatpush1.bf16.msra.mxu0 %v188
    %214 = vmatprep.subr.bf16.mxu0 0
    %215 = vmatpush1.bf16.msra.mxu0 %v187
    %216 = vmatprep.subr.bf16.mxu0 0
    %217 = vmatpush1.bf16.msra.mxu0 %v186
    %218 = vmatprep.subr.bf16.mxu0 0
    %219 = vmatpush2.bf16.msra.mxu0 0
    %220 = vmatprep.subr.bf16.mxu0 0
    %221 = vmatpush2.bf16.msra.mxu0 0
    %222 = vmatprep.subr.bf16.mxu0 0
    %223 = vmatpush2.bf16.msra.mxu0 0
    %224 = vmatprep.subr.bf16.mxu0 0
    %225 = vmatpush2.bf16.msra.mxu0 0
    %226 = vmatprep.subr.bf16.mxu0 0
    %227 = vmatpush2.bf16.msra.mxu0 0
    %228 = vmatprep.subr.bf16.mxu0 0
    %229 = vmatpush2.bf16.msra.mxu0 0
    %230 = vmatprep.subr.bf16.mxu0 0
    %231 = vmatpush2.bf16.msra.mxu0 0
    %232 = vmatprep.subr.bf16.mxu0 0
    %233 = vmatpush2.bf16.msra.mxu0 0
    %234 = vmatprep.mubr.bf16.mxu0 0
    %235 = vmatmul.mubr.bf16.gmra.mxu0 %v137
    %v236 = vpop.f32.mrf.mxu0
    %v237 = vadd.f32 0.0, %v236
    %v238 = vpop.f32.mrf.mxu0
    %v239 = vpop.f32.mrf.mxu0
    %v240 = vpop.f32.mrf.mxu0
    %241 = vdwg.mxu0
    %v242 = vadd.f32 %v136, %v237
    %243 = vst [vmem:[#allocation2] sm:$0xff] %v242
    // Predicated region
    $region38: #{tpu_custom_call.1} parent=1 // pred_check
      %p244 = pneg %p61
    $region39: #{tpu_custom_call.1} parent=1 // pred_check_branch
      %246 = sbr.rel (%p244) target = $region41
    $region40: #{tpu_custom_call.1} parent=1 // pred_region
      %v247 = vld [vmem:[#allocation2] sm:$0xff]
      %v248 = vld [vmem:[%s4] sm:$0x1]
      %v250 = vlaneseq
      %v251 = vshrl.u32 %v250, 7
      %v252 = vsub.s32 0, %v251
      %v253 = vrot.slane %v248, %v252
      %v255 = vadd.f32 %v247, %v253
      %v256 = vsub.f32 0.0, %v255
      %v257 = vmul.f32 %v256, 1.442695
      %v258 = vpow.pop %v257
      %v259 = vadd.f32 %v258, 1.0
      %v260 = vrcp.pop %v259
      %261 = vst [vmem:[#allocation9] sm:$0xff] %v260
    $region41: #{tpu_custom_call.1} parent=1 // pred_fallthru
      _
    // Predicated region
    $region42: #{tpu_custom_call.1} parent=1 // pred_check
      _
    $region43: #{tpu_custom_call.1} parent=1 // pred_check_branch
      %263 = sbr.rel (0) target = $region45
    $region44: #{tpu_custom_call.1} parent=1 // pred_region
      %s265 = ssub.s32 128, 128
      %266 = vsyncadd [#allocation5], %s265
      %s268 = sshll.u32 [#allocation9], 4
      %s269 = int_to_ptr.vmem [resolvable:$true] %s268
      %271 = dma.vmem_to_hbm [thread:$0]  %s269, 128, %s5, [#allocation5]
    $region45: #{tpu_custom_call.1} parent=1 // pred_fallthru
      _
    // Predicated region
    $region46: #{tpu_custom_call.1} parent=1 // pred_check
      _
    $region47: #{tpu_custom_call.1} parent=1 // pred_check_branch
      %273 = sbr.rel (0) target = $region49
    $region48: #{tpu_custom_call.1} parent=1 // pred_region
      %274 = dma.done [#allocation5], 128
    $region49: #{tpu_custom_call.1} parent=1 // pred_fallthru
      _
    %275 = vsyncpa [#allocation4], 1
    %276 = vsyncpa [#allocation7], 1
    %277 = vsyncpa [#allocation5], 1

</llo_original>
